<compile_context>
chip_gen: v7x
topology: tpu7x:2x2x1
jax: 0.10.0
libtpu: 0.0.40
codegen_flags: <defaults>
</compile_context>

<pallas_src>
import functools

import jax
import jax.numpy as jnp
from jax.experimental import pallas as pl
from jax.experimental.pallas import tpu as pltpu


def _round_up(x, k):
    return ((x + k - 1) // k) * k


def _convnet_kernel(seq_ref, wconv_ref, wfc_ref, bfc_ref, out_ref, *, P, K):
    # seq_ref:   (TB, n*4)    bf16  flattened sequence rows (streamed per tile)
    # wconv_ref: (K, DPAD)    bf16  conv filters, transposed, zero-padded on d
    # wfc_ref:   (DPAD, C)    bf16  fc weights, transposed (rows >= d are zero)
    # bfc_ref:   (1, C)       f32   fc bias
    # out_ref:   (TB, C)      f32   narrow, cells-wide output block
    seq = seq_ref[...]
    wconv = wconv_ref[...]

    # Conv + global max-pool as a running max over the P window positions.
    # Window p is the contiguous lane slice [4p, 4p+K) of the flattened row.
    # One small MXU matmul per position; intermediates are O(TB * DPAD).
    pooled = jnp.dot(seq[:, 0:K], wconv, preferred_element_type=jnp.float32)
    for p in range(1, P):  # P is small (n - m + 1); static unroll is fine.
        s = jnp.dot(
            seq[:, 4 * p : 4 * p + K], wconv, preferred_element_type=jnp.float32
        )
        pooled = jnp.maximum(pooled, s)
    # ReLU commutes with the position max: max_p relu(s_p) == relu(max_p s_p).
    pooled = jnp.maximum(pooled, 0.0)  # (TB, DPAD) f32

    # fc: Linear(d, cells) in bf16 on the MXU, f32 accumulation + f32 bias.
    out = jnp.dot(
        pooled.astype(jnp.bfloat16), wfc_ref[...], preferred_element_type=jnp.float32
    )
    out_ref[...] = (out + bfc_ref[...]).astype(out_ref.dtype)


def best_initial_convnet_forward(
    x, conv_weight, fc_weight, fc_bias, *, d, m, n, cells, tb=4096
):
    """x: (B, 1, n, 4) float (NCHW, like PyTorch).
    conv_weight: (d, 1, m, 4)  (PyTorch Conv2d layout)
    fc_weight:   (cells, d)    (PyTorch Linear layout)
    fc_bias:     (cells,)
    Returns (B, cells) float32.
    """
    B = x.shape[0]
    P = n - m + 1
    K = m * 4
    DPAD = _round_up(d, 128)  # lane-dense conv-output width

    # Batch tile: multiple of 8 sublanes, capped near ceil(B/2) so the grid has
    # at least two steps (dual-TC sharding on v7x); grid forced to >= 2 tiles.
    TB = max(8, min(_round_up(tb, 8), _round_up(pl.cdiv(B, 2), 8)))
    num_tiles = max(2, pl.cdiv(B, TB))
    B_pad = num_tiles * TB

    # Flatten NCHW -> lane-major (B_pad, n*4); stream in bf16 (one-hot values
    # are exact in bf16; bf16 conv weights keep error ~1e-3).
    seq = x.reshape(B, n * 4).astype(jnp.bfloat16)
    if B_pad != B:
        seq = jnp.pad(seq, ((0, B_pad - B), (0, 0)))

    # Weight prep (tiny tensors; conv weights zero-padded to a lane-dense d).
    wconv = (
        jnp.zeros((K, DPAD), jnp.bfloat16)
        .at[:, :d]
        .set(conv_weight.reshape(d, K).T.astype(jnp.bfloat16))
    )
    wfc = (
        jnp.zeros((DPAD, cells), jnp.bfloat16)
        .at[:d, :]
        .set(fc_weight.T.astype(jnp.bfloat16))
    )
    bfc = fc_bias.reshape(1, cells).astype(jnp.float32)

    kernel = functools.partial(_convnet_kernel, P=P, K=K)
    out_pad = pl.pallas_call(
        kernel,
        out_shape=jax.ShapeDtypeStruct((B_pad, cells), jnp.float32),
        grid=(num_tiles,),
        in_specs=[
            pl.BlockSpec((TB, n * 4), lambda i: (i, 0)),    # streamed per tile
            pl.BlockSpec((K, DPAD), lambda i: (0, 0)),      # VMEM-resident
            pl.BlockSpec((DPAD, cells), lambda i: (0, 0)),  # VMEM-resident
            pl.BlockSpec((1, cells), lambda i: (0, 0)),     # VMEM-resident
        ],
        # Narrow (cells-wide) output block: last dim equals the full array dim,
        # so the block is legal; the few masked stores are negligible vs. the
        # ~4x HBM-writeback saving over a 128-lane padded output.
        out_specs=pl.BlockSpec((TB, cells), lambda i: (i, 0)),
        compiler_params=pltpu.CompilerParams(
            dimension_semantics=("parallel",),
            vmem_limit_bytes=32 * 1024 * 1024,
        ),
    )(seq, wconv, wfc, bfc)
    return out_pad[:B]


def _reference_forward(x, conv_weight, fc_weight, fc_bias, *, d, m, n, cells):
    """Pure-JAX f32 reference mirroring the PyTorch forward."""
    B = x.shape[0]
    P = n - m + 1
    seq = x[:, 0]
    idx = jnp.arange(P)[:, None] + jnp.arange(m)[None, :]
    patches = seq[:, idx, :].reshape(B, P, m * 4)
    scores = jnp.einsum("bpk,dk->bpd", patches, conv_weight.reshape(d, m * 4))
    scores = jax.nn.relu(scores)
    pooled = jnp.max(scores, axis=1)
    return pooled @ fc_weight.T + fc_bias[None, :]


if __name__ == "__main__":
    # Hyperparameters consistent with the module's __init__.
    d, m, n, cells = 8, 5, 16, 4
    sigma_motifs, sigma_net = 0.5, 0.3
    B = 2

    key = jax.random.PRNGKey(0)
    kx, kc, kf = jax.random.split(key, 3)

    # Deterministic parameter init mirroring weights_init:
    #   Conv2d weight ~ N(0, sigma_motifs**2) (std = sigma_motifs**2)
    #   Linear weight ~ N(0, sigma_net**2), bias = 1e-5
    # TODO(synk): optimizer/criterion construction and loguniform weight-decay
    # draws are training-time state with no forward-pass Pallas equivalent.
    conv_weight = jax.random.normal(kc, (d, 1, m, 4), dtype=jnp.float32) * (
        sigma_motifs**2
    )
    fc_weight = jax.random.normal(kf, (cells, d), dtype=jnp.float32) * (sigma_net**2)
    fc_bias = jnp.full((cells,), 1e-5, dtype=jnp.float32)

    # Input: NCHW (B, 1, n, 4) one-hot DNA-style sequence (exact in bf16).
    bases = jax.random.randint(kx, (B, n), 0, 4)
    x = jax.nn.one_hot(bases, 4, dtype=jnp.float32).reshape(B, 1, n, 4)

    fwd = jax.jit(
        best_initial_convnet_forward,
        static_argnames=("d", "m", "n", "cells", "tb"),
    )
    out = fwd(x, conv_weight, fc_weight, fc_bias, d=d, m=m, n=n, cells=cells)
    out = jax.block_until_ready(out)

    ref = _reference_forward(
        x, conv_weight, fc_weight, fc_bias, d=d, m=m, n=n, cells=cells
    )
    assert out.shape == (B, cells)
    # Tolerance loosened vs. pure-f32: conv weights, pooled activations and fc
    # weights travel through the MXU in bf16 (f32 accumulation, error ~1e-3).
    assert jnp.allclose(out, ref, atol=1e-2, rtol=1e-2)

    print("KERNEL_OK")
</pallas_src>

<mosaic_0001>
module attributes {stable_mosaic.version = 11 : i64} {
  func.func @_convnet_kernel(%arg0: i32, %arg1: memref<8x64xbf16, #tpu.memory_space<vmem>>, %arg2: memref<20x128xbf16, #tpu.memory_space<vmem>>, %arg3: memref<128x4xbf16, #tpu.memory_space<vmem>>, %arg4: memref<1x4xf32, #tpu.memory_space<vmem>>, %arg5: memref<8x4xf32, #tpu.memory_space<vmem>>) attributes {dimension_semantics = [#tpu.dimension_semantics<parallel>], iteration_bounds = array<i64: 2>, scalar_prefetch = 0 : i64, scratch_operands = 0 : i64, tpu.core_type = #tpu.core_type<tc>, window_params = [{transform_indices = @transform_0, window_bounds = array<i64: 8, 64>}, {pipeline_mode = #tpu.pipeline_mode<synchronous>, transform_indices = @transform_1, window_bounds = array<i64: 20, 128>}, {pipeline_mode = #tpu.pipeline_mode<synchronous>, transform_indices = @transform_2, window_bounds = array<i64: 128, 4>}, {pipeline_mode = #tpu.pipeline_mode<synchronous>, transform_indices = @transform_3, window_bounds = array<i64: 1, 4>}, {transform_indices = @transform_4, window_bounds = array<i64: 8, 4>}]} {
    %c0 = arith.constant 0 : index
    %c0_0 = arith.constant 0 : index
    %0 = vector.load %arg1[%c0, %c0_0] : memref<8x64xbf16, #tpu.memory_space<vmem>>, vector<8x64xbf16>
    %c0_1 = arith.constant 0 : index
    %c0_2 = arith.constant 0 : index
    %1 = vector.load %arg2[%c0_1, %c0_2] : memref<20x128xbf16, #tpu.memory_space<vmem>>, vector<20x128xbf16>
    %2 = vector.extract_strided_slice %0 {offsets = [0, 0], sizes = [8, 20], strides = [1, 1]} : vector<8x64xbf16> to vector<8x20xbf16>
    %cst = arith.constant dense<0.000000e+00> : vector<8x128xf32>
    %3 = tpu.matmul %2, %1, %cst {dimension_numbers = #tpu.dot_dimension_numbers<[1], [0], [0], [1], [0, 0, 1, 1], [], []>} : vector<8x20xbf16>, vector<20x128xbf16>, vector<8x128xf32> -> vector<8x128xf32>
    %4 = vector.extract_strided_slice %0 {offsets = [0, 4], sizes = [8, 20], strides = [1, 1]} : vector<8x64xbf16> to vector<8x20xbf16>
    %cst_3 = arith.constant dense<0.000000e+00> : vector<8x128xf32>
    %5 = tpu.matmul %4, %1, %cst_3 {dimension_numbers = #tpu.dot_dimension_numbers<[1], [0], [0], [1], [0, 0, 1, 1], [], []>} : vector<8x20xbf16>, vector<20x128xbf16>, vector<8x128xf32> -> vector<8x128xf32>
    %6 = arith.maximumf %3, %5 : vector<8x128xf32>
    %7 = vector.extract_strided_slice %0 {offsets = [0, 8], sizes = [8, 20], strides = [1, 1]} : vector<8x64xbf16> to vector<8x20xbf16>
    %cst_4 = arith.constant dense<0.000000e+00> : vector<8x128xf32>
    %8 = tpu.matmul %7, %1, %cst_4 {dimension_numbers = #tpu.dot_dimension_numbers<[1], [0], [0], [1], [0, 0, 1, 1], [], []>} : vector<8x20xbf16>, vector<20x128xbf16>, vector<8x128xf32> -> vector<8x128xf32>
    %9 = arith.maximumf %6, %8 : vector<8x128xf32>
    %10 = vector.extract_strided_slice %0 {offsets = [0, 12], sizes = [8, 20], strides = [1, 1]} : vector<8x64xbf16> to vector<8x20xbf16>
    %cst_5 = arith.constant dense<0.000000e+00> : vector<8x128xf32>
    %11 = tpu.matmul %10, %1, %cst_5 {dimension_numbers = #tpu.dot_dimension_numbers<[1], [0], [0], [1], [0, 0, 1, 1], [], []>} : vector<8x20xbf16>, vector<20x128xbf16>, vector<8x128xf32> -> vector<8x128xf32>
    %12 = arith.maximumf %9, %11 : vector<8x128xf32>
    %13 = vector.extract_strided_slice %0 {offsets = [0, 16], sizes = [8, 20], strides = [1, 1]} : vector<8x64xbf16> to vector<8x20xbf16>
    %cst_6 = arith.constant dense<0.000000e+00> : vector<8x128xf32>
    %14 = tpu.matmul %13, %1, %cst_6 {dimension_numbers = #tpu.dot_dimension_numbers<[1], [0], [0], [1], [0, 0, 1, 1], [], []>} : vector<8x20xbf16>, vector<20x128xbf16>, vector<8x128xf32> -> vector<8x128xf32>
    %15 = arith.maximumf %12, %14 : vector<8x128xf32>
    %16 = vector.extract_strided_slice %0 {offsets = [0, 20], sizes = [8, 20], strides = [1, 1]} : vector<8x64xbf16> to vector<8x20xbf16>
    %cst_7 = arith.constant dense<0.000000e+00> : vector<8x128xf32>
    %17 = tpu.matmul %16, %1, %cst_7 {dimension_numbers = #tpu.dot_dimension_numbers<[1], [0], [0], [1], [0, 0, 1, 1], [], []>} : vector<8x20xbf16>, vector<20x128xbf16>, vector<8x128xf32> -> vector<8x128xf32>
    %18 = arith.maximumf %15, %17 : vector<8x128xf32>
    %19 = vector.extract_strided_slice %0 {offsets = [0, 24], sizes = [8, 20], strides = [1, 1]} : vector<8x64xbf16> to vector<8x20xbf16>
    %cst_8 = arith.constant dense<0.000000e+00> : vector<8x128xf32>
    %20 = tpu.matmul %19, %1, %cst_8 {dimension_numbers = #tpu.dot_dimension_numbers<[1], [0], [0], [1], [0, 0, 1, 1], [], []>} : vector<8x20xbf16>, vector<20x128xbf16>, vector<8x128xf32> -> vector<8x128xf32>
    %21 = arith.maximumf %18, %20 : vector<8x128xf32>
    %22 = vector.extract_strided_slice %0 {offsets = [0, 28], sizes = [8, 20], strides = [1, 1]} : vector<8x64xbf16> to vector<8x20xbf16>
    %cst_9 = arith.constant dense<0.000000e+00> : vector<8x128xf32>
    %23 = tpu.matmul %22, %1, %cst_9 {dimension_numbers = #tpu.dot_dimension_numbers<[1], [0], [0], [1], [0, 0, 1, 1], [], []>} : vector<8x20xbf16>, vector<20x128xbf16>, vector<8x128xf32> -> vector<8x128xf32>
    %24 = arith.maximumf %21, %23 : vector<8x128xf32>
    %25 = vector.extract_strided_slice %0 {offsets = [0, 32], sizes = [8, 20], strides = [1, 1]} : vector<8x64xbf16> to vector<8x20xbf16>
    %cst_10 = arith.constant dense<0.000000e+00> : vector<8x128xf32>
    %26 = tpu.matmul %25, %1, %cst_10 {dimension_numbers = #tpu.dot_dimension_numbers<[1], [0], [0], [1], [0, 0, 1, 1], [], []>} : vector<8x20xbf16>, vector<20x128xbf16>, vector<8x128xf32> -> vector<8x128xf32>
    %27 = arith.maximumf %24, %26 : vector<8x128xf32>
    %28 = vector.extract_strided_slice %0 {offsets = [0, 36], sizes = [8, 20], strides = [1, 1]} : vector<8x64xbf16> to vector<8x20xbf16>
    %cst_11 = arith.constant dense<0.000000e+00> : vector<8x128xf32>
    %29 = tpu.matmul %28, %1, %cst_11 {dimension_numbers = #tpu.dot_dimension_numbers<[1], [0], [0], [1], [0, 0, 1, 1], [], []>} : vector<8x20xbf16>, vector<20x128xbf16>, vector<8x128xf32> -> vector<8x128xf32>
    %30 = arith.maximumf %27, %29 : vector<8x128xf32>
    %31 = vector.extract_strided_slice %0 {offsets = [0, 40], sizes = [8, 20], strides = [1, 1]} : vector<8x64xbf16> to vector<8x20xbf16>
    %cst_12 = arith.constant dense<0.000000e+00> : vector<8x128xf32>
    %32 = tpu.matmul %31, %1, %cst_12 {dimension_numbers = #tpu.dot_dimension_numbers<[1], [0], [0], [1], [0, 0, 1, 1], [], []>} : vector<8x20xbf16>, vector<20x128xbf16>, vector<8x128xf32> -> vector<8x128xf32>
    %33 = arith.maximumf %30, %32 : vector<8x128xf32>
    %34 = vector.extract_strided_slice %0 {offsets = [0, 44], sizes = [8, 20], strides = [1, 1]} : vector<8x64xbf16> to vector<8x20xbf16>
    %cst_13 = arith.constant dense<0.000000e+00> : vector<8x128xf32>
    %35 = tpu.matmul %34, %1, %cst_13 {dimension_numbers = #tpu.dot_dimension_numbers<[1], [0], [0], [1], [0, 0, 1, 1], [], []>} : vector<8x20xbf16>, vector<20x128xbf16>, vector<8x128xf32> -> vector<8x128xf32>
    %36 = arith.maximumf %33, %35 : vector<8x128xf32>
    %cst_14 = arith.constant 0.000000e+00 : f32
    %37 = vector.broadcast %cst_14 : f32 to vector<8x128xf32>
    %38 = arith.maximumf %36, %37 : vector<8x128xf32>
    %39 = arith.truncf %38 : vector<8x128xf32> to vector<8x128xbf16>
    %c0_15 = arith.constant 0 : index
    %c0_16 = arith.constant 0 : index
    %40 = vector.load %arg3[%c0_15, %c0_16] : memref<128x4xbf16, #tpu.memory_space<vmem>>, vector<128x4xbf16>
    %cst_17 = arith.constant dense<0.000000e+00> : vector<8x4xf32>
    %41 = tpu.matmul %39, %40, %cst_17 {dimension_numbers = #tpu.dot_dimension_numbers<[1], [0], [0], [1], [0, 0, 1, 1], [], []>} : vector<8x128xbf16>, vector<128x4xbf16>, vector<8x4xf32> -> vector<8x4xf32>
    %c0_18 = arith.constant 0 : index
    %c0_19 = arith.constant 0 : index
    %42 = vector.load %arg4[%c0_18, %c0_19] : memref<1x4xf32, #tpu.memory_space<vmem>>, vector<1x4xf32>
    %43 = vector.broadcast %42 : vector<1x4xf32> to vector<8x4xf32>
    %44 = arith.addf %41, %43 : vector<8x4xf32>
    %c0_20 = arith.constant 0 : index
    %c0_21 = arith.constant 0 : index
    %45 = vector.load %arg5[%c0_20, %c0_21] : memref<8x4xf32, #tpu.memory_space<vmem>>, vector<8x4xf32>
    tpu.vector_store %arg5[%c0_20, %c0_21], %44 {strides = array<i32>} : memref<8x4xf32, #tpu.memory_space<vmem>>, vector<8x4xf32>,
    return
  }
  func.func @transform_0(%arg0: i32) -> (i32, i32) {
    %c0_i32 = arith.constant 0 : i32
    %c0_i32_0 = arith.constant 0 : i32
    return %arg0, %c0_i32 : i32, i32
  }
  func.func @transform_1(%arg0: i32) -> (i32, i32) {
    %c0_i32 = arith.constant 0 : i32
    %c0_i32_0 = arith.constant 0 : i32
    %c0_i32_1 = arith.constant 0 : i32
    return %c0_i32, %c0_i32_0 : i32, i32
  }
  func.func @transform_2(%arg0: i32) -> (i32, i32) {
    %c0_i32 = arith.constant 0 : i32
    %c0_i32_0 = arith.constant 0 : i32
    %c0_i32_1 = arith.constant 0 : i32
    return %c0_i32, %c0_i32_0 : i32, i32
  }
  func.func @transform_3(%arg0: i32) -> (i32, i32) {
    %c0_i32 = arith.constant 0 : i32
    %c0_i32_0 = arith.constant 0 : i32
    %c0_i32_1 = arith.constant 0 : i32
    return %c0_i32, %c0_i32_0 : i32, i32
  }
  func.func @transform_4(%arg0: i32) -> (i32, i32) {
    %c0_i32 = arith.constant 0 : i32
    %c0_i32_0 = arith.constant 0 : i32
    return %arg0, %c0_i32 : i32, i32
  }
}

</mosaic_0001>

<llo_original>
// kernel: best_initial_convnet_forward.1
$region0: #{best_initial_convnet_forward.1}
  #allocation0 [shape = 'u32[]', space=smem, size = 0x4, offset = 0x4, fixed_abs, tag = 'smem constant byte address 0x4 - core index']
  #allocation1 [shape = 'u32[144,128]{1,0:T(1,128)}', space=vmem, size = 0x12000, scoped, tag = 'internal scratch']
  %s0 = inlined_call_operand.vmem [shape: bf16[16,64], index: 0, kind: input, shape index: {}]
  %s1 = inlined_call_operand.vmem [shape: bf16[20,128], index: 1, kind: input, shape index: {}]
  %s2 = inlined_call_operand.vmem [shape: bf16[128,4], index: 2, kind: input, shape index: {}]
  %s3 = inlined_call_operand.vmem [shape: f32[1,4], index: 3, kind: input, shape index: {}]
  %s4 = inlined_call_operand.vmem [shape: f32[16,4], index: 4, kind: output, shape index: {}]
  %s5 = sld [smem:[#allocation0]]
  $region49: #{best_initial_convnet_forward.1} parent=0
    _
  %s7 = ssub.s32 1, %s5
  %s8 = scalar_select 0, %s7, %s5
  loop: start=0, step=1, limit=4
  $region2: #{best_initial_convnet_forward.1} parent=0 // loop_pre_header
    _
  $region3: #{best_initial_convnet_forward.1} parent=0 // loop_header
    %s10 = sphi 0, %s14
    %p11 = scmp.ge.s32.totalorder %s10, 4
    %s20 = sphi 0, %s22
    %s23 = sphi 0, %s20
    %s24 = sphi 0, %s23
    %s40 = sphi 0, %s24
    %s44 = sphi 0, %s44
    %s46 = sphi 0, %s44
    %s47 = sphi 0, %s46
    %s61 = sphi 0, %s47
    %s65 = sphi 0, %s65
    %s67 = sphi 0, %s65
    %s68 = sphi 0, %s67
    %s82 = sphi 0, %s68
    %s86 = sphi 0, %s86
    %s88 = sphi 0, %s86
    %s89 = sphi 0, %s88
    %s103 = sphi 0, %s89
    %s109 = sphi 0, %s111
    %s112 = sphi 0, %s109
    %s113 = sphi 0, %s112
    %s129 = sphi 0, %s113
  $region4: #{best_initial_convnet_forward.1} parent=0 // loop_header_branch
    %13 = sbr.rel (%p11) target = $region8
  $region5: #{best_initial_convnet_forward.1} parent=0 // loop_body
    %s15 = ssub.s32 %s10, 1
    %s16 = ssub.s32 %s10, 2
    %s17 = sadd.s32 %s10, 1
    %s18 = ssub.s32 %s10, %s17
    %p19 = scmp.eq.s32.totalorder %s18, 0
    %s21 = sadd.s32 %s20, 1
    %s22 = scalar_select %p19, %s20, %s21
    %p25 = pneg %p19
    %p26 = scmp.eq.s32.totalorder %s10, 1
    %p27 = por %p25, %p26
    %p28 = scmp.ne.s32.totalorder %s20, %s23
    %p29 = scmp.eq.s32.totalorder %s10, 0
    %p30 = por %p28, %p29
    %p31 = scmp.ne.s32.totalorder %s20, %s23
    %p32 = scmp.eq.s32.totalorder %s15, 1
    %p33 = por %p31, %p32
    %p34 = scmp.ne.s32.totalorder %s23, %s24
    %p35 = scmp.eq.s32.totalorder %s15, 0
    %p36 = por %p34, %p35
    %p37 = scmp.ne.s32.totalorder %s23, %s24
    %p38 = scmp.eq.s32.totalorder %s16, 1
    %p39 = por %p37, %p38
    %p41 = scmp.ne.s32.totalorder %s24, %s40
    %p42 = scmp.eq.s32.totalorder %s16, 0
    %p43 = por %p41, %p42
    %s45 = sadd.s32 %s44, 1
    %p48 = scmp.eq.s32.totalorder %s10, 1
    %p49 = scmp.ne.s32.totalorder %s44, %s46
    %p50 = scmp.eq.s32.totalorder %s10, 0
    %p51 = por %p49, %p50
    %p52 = scmp.ne.s32.totalorder %s44, %s46
    %p53 = scmp.eq.s32.totalorder %s15, 1
    %p54 = por %p52, %p53
    %p55 = scmp.ne.s32.totalorder %s46, %s47
    %p56 = scmp.eq.s32.totalorder %s15, 0
    %p57 = por %p55, %p56
    %p58 = scmp.ne.s32.totalorder %s46, %s47
    %p59 = scmp.eq.s32.totalorder %s16, 1
    %p60 = por %p58, %p59
    %p62 = scmp.ne.s32.totalorder %s47, %s61
    %p63 = scmp.eq.s32.totalorder %s16, 0
    %p64 = por %p62, %p63
    %s66 = sadd.s32 %s65, 1
    %p69 = scmp.eq.s32.totalorder %s10, 1
    %p70 = scmp.ne.s32.totalorder %s65, %s67
    %p71 = scmp.eq.s32.totalorder %s10, 0
    %p72 = por %p70, %p71
    %p73 = scmp.ne.s32.totalorder %s65, %s67
    %p74 = scmp.eq.s32.totalorder %s15, 1
    %p75 = por %p73, %p74
    %p76 = scmp.ne.s32.totalorder %s67, %s68
    %p77 = scmp.eq.s32.totalorder %s15, 0
    %p78 = por %p76, %p77
    %p79 = scmp.ne.s32.totalorder %s67, %s68
    %p80 = scmp.eq.s32.totalorder %s16, 1
    %p81 = por %p79, %p80
    %p83 = scmp.ne.s32.totalorder %s68, %s82
    %p84 = scmp.eq.s32.totalorder %s16, 0
    %p85 = por %p83, %p84
    %s87 = sadd.s32 %s86, 1
    %p90 = scmp.eq.s32.totalorder %s10, 1
    %p91 = scmp.ne.s32.totalorder %s86, %s88
    %p92 = scmp.eq.s32.totalorder %s10, 0
    %p93 = por %p91, %p92
    %p94 = scmp.ne.s32.totalorder %s86, %s88
    %p95 = scmp.eq.s32.totalorder %s15, 1
    %p96 = por %p94, %p95
    %p97 = scmp.ne.s32.totalorder %s88, %s89
    %p98 = scmp.eq.s32.totalorder %s15, 0
    %p99 = por %p97, %p98
    %p100 = scmp.ne.s32.totalorder %s88, %s89
    %p101 = scmp.eq.s32.totalorder %s16, 1
    %p102 = por %p100, %p101
    %p104 = scmp.ne.s32.totalorder %s89, %s103
    %p105 = scmp.eq.s32.totalorder %s16, 0
    %p106 = por %p104, %p105
    %s107 = ssub.s32 %s10, %s17
    %p108 = scmp.eq.s32.totalorder %s107, 0
    %s110 = sadd.s32 %s109, 1
    %s111 = scalar_select %p108, %s109, %s110
    %p114 = pneg %p108
    %p115 = scmp.eq.s32.totalorder %s10, 1
    %p116 = por %p114, %p115
    %p117 = scmp.ne.s32.totalorder %s109, %s112
    %p118 = scmp.eq.s32.totalorder %s10, 0
    %p119 = por %p117, %p118
    %p120 = scmp.ne.s32.totalorder %s109, %s112
    %p121 = scmp.eq.s32.totalorder %s15, 1
    %p122 = por %p120, %p121
    %p123 = scmp.ne.s32.totalorder %s112, %s113
    %p124 = scmp.eq.s32.totalorder %s15, 0
    %p125 = por %p123, %p124
    %p126 = scmp.ne.s32.totalorder %s112, %s113
    %p127 = scmp.eq.s32.totalorder %s16, 1
    %p128 = por %p126, %p127
    %p130 = scmp.ne.s32.totalorder %s113, %s129
    %p131 = scmp.eq.s32.totalorder %s16, 0
    %p132 = por %p130, %p131
    %p133 = scmp.le.s32.totalorder 1, %s10
    %p134 = scmp.lt.s32.totalorder %s10, 3
    %p135 = pnand %p133, %p134
    %p136 = pneg %p135
    // Predicated region
    $region9: #{best_initial_convnet_forward.1} parent=5 // pred_check
      _
    $region10: #{best_initial_convnet_forward.1} parent=5 // pred_check_branch
      %138 = sbr.rel (%p135) target = $region12
    $region11: #{best_initial_convnet_forward.1} parent=5 // pred_region
      %s139 = ssub.s32 %s10, 1
      // Predicated region
      $region13: #{best_initial_convnet_forward.1} parent=11 // pred_check
        %p140 = pneg %p57
      $region14: #{best_initial_convnet_forward.1} parent=11 // pred_check_branch
        %142 = sbr.rel (%p140) target = $region16
      $region15: #{best_initial_convnet_forward.1} parent=11 // pred_region
        _
      $region16: #{best_initial_convnet_forward.1} parent=11 // pred_fallthru
        _
      // Predicated region
      $region17: #{best_initial_convnet_forward.1} parent=11 // pred_check
        %p143 = pneg %p78
      $region18: #{best_initial_convnet_forward.1} parent=11 // pred_check_branch
        %145 = sbr.rel (%p143) target = $region20
      $region19: #{best_initial_convnet_forward.1} parent=11 // pred_region
        _
      $region20: #{best_initial_convnet_forward.1} parent=11 // pred_fallthru
        _
      // Predicated region
      $region21: #{best_initial_convnet_forward.1} parent=11 // pred_check
        %p146 = pneg %p99
      $region22: #{best_initial_convnet_forward.1} parent=11 // pred_check_branch
        %148 = sbr.rel (%p146) target = $region24
      $region23: #{best_initial_convnet_forward.1} parent=11 // pred_region
        _
      $region24: #{best_initial_convnet_forward.1} parent=11 // pred_fallthru
        _
    $region12: #{best_initial_convnet_forward.1} parent=5 // pred_fallthru
      _
    %p149 = scmp.lt.s32.totalorder %s10, 2
    // Predicated region
    $region25: #{best_initial_convnet_forward.1} parent=5 // pred_check
      %p150 = pneg %p149
    $region26: #{best_initial_convnet_forward.1} parent=5 // pred_check_branch
      %152 = sbr.rel (%p150) target = $region28
    $region27: #{best_initial_convnet_forward.1} parent=5 // pred_region
      // Predicated region
      $region29: #{best_initial_convnet_forward.1} parent=27 // pred_check
        %p153 = pneg %p30
      $region30: #{best_initial_convnet_forward.1} parent=27 // pred_check_branch
        %155 = sbr.rel (%p153) target = $region32
      $region31: #{best_initial_convnet_forward.1} parent=27 // pred_region
        %p156 = scmp.lt.s32.totalorder %s10, 1
        %s157 = scalar_select %p156, %s10, 1
        %s158 = smul.addr %s157, 4
        %s159 = scalar_lea.vmem %s0, %s158
      $region32: #{best_initial_convnet_forward.1} parent=27 // pred_fallthru
        _
    $region28: #{best_initial_convnet_forward.1} parent=5 // pred_fallthru
      _
    %p160 = scmp.le.s32.totalorder 1, %s10
    %p161 = scmp.lt.s32.totalorder %s10, 3
    %p162 = pnand %p160, %p161
    %p163 = pneg %p162
    // Predicated region
    $region33: #{best_initial_convnet_forward.1} parent=5 // pred_check
      _
    $region34: #{best_initial_convnet_forward.1} parent=5 // pred_check_branch
      %165 = sbr.rel (%p162) target = $region36
    $region35: #{best_initial_convnet_forward.1} parent=5 // pred_region
      %s166 = ssub.s32 %s10, 1
      %p167 = scmp.lt.s32.totalorder %s15, 1
      %s168 = scalar_select %p167, %s15, 1
      %s169 = smul.addr %s168, 4
      %s170 = scalar_lea.vmem %s0, %s169
      %p171 = pneg %p36
      %p172 = pneg %p33
      %p173 = pneg %p57
      %p174 = pneg %p54
      %p175 = pneg %p78
      %p176 = pneg %p75
      %p177 = pneg %p99
      %p178 = pneg %p96
      %p179 = pneg %p125
      %p180 = pneg %p122
      %p181 = scmp.lt.s32.totalorder %s15, 1
      %s182 = scalar_select %p181, %s15, 1
      %s183 = smul.addr %s182, 8
      %s184 = scalar_lea.vmem %s4, %s183
      %p185 = scmp.lt.s32.totalorder %s15, 1
      %s186 = scalar_select %p185, %s15, 1
      %s187 = smul.addr %s186, 4
      %s188 = scalar_lea.vmem %s0, %s187
      %p189 = scmp.lt.s32.totalorder %s15, 1
      %s190 = scalar_select %p189, %s15, 1
      %s191 = smul.addr %s190, 8
      %s192 = scalar_lea.vmem %s4, %s191
      %v194 = vld [vmem:[%s188] sm:$0xf]
      %v195 = vld [vmem:[%s1] sm:$0xf]
      %v196 = vld [vmem:[%s1 + $0x4] sm:$0xf]
      %v197 = vld [vmem:[%s1 + $0x8] sm:$0x3]
      %v201 = vunpack.c.l.b16 %v195
      %v202 = vunpack.c.l.b16 %v196
      %v203 = vunpack.c.l.b16 %v197
      %v204 = vpack.c.b16 %v202, %v201
      %v205 = vpack.c.b16 %v203, %v203
      %vm207 = vcmask 162816
      %v209 = vsel %vm207, %v194, 0
      %vm211 = vcmask 1041408
      %v213 = vsel %vm211, %v205, 0
      %215 = vmatprep.subr.bf16.mxu0 0
      %216 = vmatpush1.bf16.msra.mxu0 %v204
      %217 = vmatprep.subr.bf16.mxu0 0
      %218 = vmatpush1.bf16.msra.mxu0 %v213
      %219 = vmatprep.subr.bf16.mxu0 0
      %220 = vmatpush1.bf16.msra.mxu0 0
      %221 = vmatprep.subr.bf16.mxu0 0
      %222 = vmatpush1.bf16.msra.mxu0 0
      %223 = vmatprep.subr.bf16.mxu0 0
      %224 = vmatpush1.bf16.msra.mxu0 0
      %225 = vmatprep.subr.bf16.mxu0 0
      %226 = vmatpush1.bf16.msra.mxu0 0
      %227 = vmatprep.subr.bf16.mxu0 0
      %228 = vmatpush1.bf16.msra.mxu0 0
      %229 = vmatprep.subr.bf16.mxu0 0
      %230 = vmatpush1.bf16.msra.mxu0 0
      %231 = vmatprep.subr.bf16.mxu0 0
      %232 = vmatpush1.bf16.msra.mxu0 0
      %233 = vmatprep.subr.bf16.mxu0 0
      %234 = vmatpush1.bf16.msra.mxu0 0
      %235 = vmatprep.subr.bf16.mxu0 0
      %236 = vmatpush1.bf16.msra.mxu0 0
      %237 = vmatprep.subr.bf16.mxu0 0
      %238 = vmatpush1.bf16.msra.mxu0 0
      %239 = vmatprep.subr.bf16.mxu0 0
      %240 = vmatpush1.bf16.msra.mxu0 0
      %241 = vmatprep.subr.bf16.mxu0 0
      %242 = vmatpush1.bf16.msra.mxu0 0
      %243 = vmatprep.subr.bf16.mxu0 0
      %244 = vmatpush1.bf16.msra.mxu0 0
      %245 = vmatprep.subr.bf16.mxu0 0
      %246 = vmatpush1.bf16.msra.mxu0 0
      %247 = vmatprep.mubr.bf16.mxu0 0
      %248 = vmatmul.mubr.bf16.gmra.mrb[0].mxu0 %v209
      %v249 = vpop.f32.mrb[0].mxu0
      %v250 = vadd.f32 0.0, %v249
      %v251 = vpop.f32.mrb[0].mxu0
      %v252 = vpop.f32.mrb[0].mxu0
      %v253 = vpop.f32.mrb[0].mxu0
      %254 = vdwg.mxu0
      %v256 = vunpack.c.l.b16 %v194
      %v257 = vpack.c.b16 %v256, %v256
      %258 = vrot.lane.b32.xlu0 %v257, 124
      %v259 = vpop.permute.xlu0 %258
      %v261 = vsel %vm207, %v259, 0
      %263 = vmatprep.subr.bf16.mxu0 0
      %264 = vmatpush1.bf16.msra.mxu0 %v204
      %265 = vmatprep.subr.bf16.mxu0 0
      %266 = vmatpush1.bf16.msra.mxu0 %v213
      %267 = vmatprep.subr.bf16.mxu0 0
      %268 = vmatpush1.bf16.msra.mxu0 0
      %269 = vmatprep.subr.bf16.mxu0 0
      %270 = vmatpush1.bf16.msra.mxu0 0
      %271 = vmatprep.subr.bf16.mxu0 0
      %272 = vmatpush1.bf16.msra.mxu0 0
      %273 = vmatprep.subr.bf16.mxu0 0
      %274 = vmatpush1.bf16.msra.mxu0 0
      %275 = vmatprep.subr.bf16.mxu0 0
      %276 = vmatpush1.bf16.msra.mxu0 0
      %277 = vmatprep.subr.bf16.mxu0 0
      %278 = vmatpush1.bf16.msra.mxu0 0
      %279 = vmatprep.subr.bf16.mxu0 0
      %280 = vmatpush1.bf16.msra.mxu0 0
      %281 = vmatprep.subr.bf16.mxu0 0
      %282 = vmatpush1.bf16.msra.mxu0 0
      %283 = vmatprep.subr.bf16.mxu0 0
      %284 = vmatpush1.bf16.msra.mxu0 0
      %285 = vmatprep.subr.bf16.mxu0 0
      %286 = vmatpush1.bf16.msra.mxu0 0
      %287 = vmatprep.subr.bf16.mxu0 0
      %288 = vmatpush1.bf16.msra.mxu0 0
      %289 = vmatprep.subr.bf16.mxu0 0
      %290 = vmatpush1.bf16.msra.mxu0 0
      %291 = vmatprep.subr.bf16.mxu0 0
      %292 = vmatpush1.bf16.msra.mxu0 0
      %293 = vmatprep.subr.bf16.mxu0 0
      %294 = vmatpush1.bf16.msra.mxu0 0
      %295 = vmatprep.mubr.bf16.mxu0 0
      %296 = vmatmul.mubr.bf16.gmra.mrb[0].mxu0 %v261
      %v297 = vpop.f32.mrb[0].mxu0
      %v298 = vadd.f32 0.0, %v297
      %v299 = vpop.f32.mrb[0].mxu0
      %v300 = vpop.f32.mrb[0].mxu0
      %v301 = vpop.f32.mrb[0].mxu0
      %302 = vdwg.mxu0
      %v303 = vmax.f32 %v250, %v298
      %304 = vrot.lane.b32.xlu0 %v257, 120
      %v305 = vpop.permute.xlu0 %304
      %v307 = vsel %vm207, %v305, 0
      %309 = vmatprep.subr.bf16.mxu0 0
      %310 = vmatpush1.bf16.msra.mxu0 %v204
      %311 = vmatprep.subr.bf16.mxu0 0
      %312 = vmatpush1.bf16.msra.mxu0 %v213
      %313 = vmatprep.subr.bf16.mxu0 0
      %314 = vmatpush1.bf16.msra.mxu0 0
      %315 = vmatprep.subr.bf16.mxu0 0
      %316 = vmatpush1.bf16.msra.mxu0 0
      %317 = vmatprep.subr.bf16.mxu0 0
      %318 = vmatpush1.bf16.msra.mxu0 0
      %319 = vmatprep.subr.bf16.mxu0 0
      %320 = vmatpush1.bf16.msra.mxu0 0
      %321 = vmatprep.subr.bf16.mxu0 0
      %322 = vmatpush1.bf16.msra.mxu0 0
      %323 = vmatprep.subr.bf16.mxu0 0
      %324 = vmatpush1.bf16.msra.mxu0 0
      %325 = vmatprep.subr.bf16.mxu0 0
      %326 = vmatpush1.bf16.msra.mxu0 0
      %327 = vmatprep.subr.bf16.mxu0 0
      %328 = vmatpush1.bf16.msra.mxu0 0
      %329 = vmatprep.subr.bf16.mxu0 0
      %330 = vmatpush1.bf16.msra.mxu0 0
      %331 = vmatprep.subr.bf16.mxu0 0
      %332 = vmatpush1.bf16.msra.mxu0 0
      %333 = vmatprep.subr.bf16.mxu0 0
      %334 = vmatpush1.bf16.msra.mxu0 0
      %335 = vmatprep.subr.bf16.mxu0 0
      %336 = vmatpush1.bf16.msra.mxu0 0
      %337 = vmatprep.subr.bf16.mxu0 0
      %338 = vmatpush1.bf16.msra.mxu0 0
      %339 = vmatprep.subr.bf16.mxu0 0
      %340 = vmatpush1.bf16.msra.mxu0 0
      %341 = vmatprep.mubr.bf16.mxu0 0
      %342 = vmatmul.mubr.bf16.gmra.mrb[0].mxu0 %v307
      %v343 = vpop.f32.mrb[0].mxu0
      %v344 = vadd.f32 0.0, %v343
      %v345 = vpop.f32.mrb[0].mxu0
      %v346 = vpop.f32.mrb[0].mxu0
      %v347 = vpop.f32.mrb[0].mxu0
      %348 = vdwg.mxu0
      %v349 = vmax.f32 %v303, %v344
      %350 = vrot.lane.b32.xlu0 %v257, 116
      %v351 = vpop.permute.xlu0 %350
      %v353 = vsel %vm207, %v351, 0
      %355 = vmatprep.subr.bf16.mxu0 0
      %356 = vmatpush1.bf16.msra.mxu0 %v204
      %357 = vmatprep.subr.bf16.mxu0 0
      %358 = vmatpush1.bf16.msra.mxu0 %v213
      %359 = vmatprep.subr.bf16.mxu0 0
      %360 = vmatpush1.bf16.msra.mxu0 0
      %361 = vmatprep.subr.bf16.mxu0 0
      %362 = vmatpush1.bf16.msra.mxu0 0
      %363 = vmatprep.subr.bf16.mxu0 0
      %364 = vmatpush1.bf16.msra.mxu0 0
      %365 = vmatprep.subr.bf16.mxu0 0
      %366 = vmatpush1.bf16.msra.mxu0 0
      %367 = vmatprep.subr.bf16.mxu0 0
      %368 = vmatpush1.bf16.msra.mxu0 0
      %369 = vmatprep.subr.bf16.mxu0 0
      %370 = vmatpush1.bf16.msra.mxu0 0
      %371 = vmatprep.subr.bf16.mxu0 0
      %372 = vmatpush1.bf16.msra.mxu0 0
      %373 = vmatprep.subr.bf16.mxu0 0
      %374 = vmatpush1.bf16.msra.mxu0 0
      %375 = vmatprep.subr.bf16.mxu0 0
      %376 = vmatpush1.bf16.msra.mxu0 0
      %377 = vmatprep.subr.bf16.mxu0 0
      %378 = vmatpush1.bf16.msra.mxu0 0
      %379 = vmatprep.subr.bf16.mxu0 0
      %380 = vmatpush1.bf16.msra.mxu0 0
      %381 = vmatprep.subr.bf16.mxu0 0
      %382 = vmatpush1.bf16.msra.mxu0 0
      %383 = vmatprep.subr.bf16.mxu0 0
      %384 = vmatpush1.bf16.msra.mxu0 0
      %385 = vmatprep.subr.bf16.mxu0 0
      %386 = vmatpush1.bf16.msra.mxu0 0
      %387 = vmatprep.mubr.bf16.mxu0 0
      %388 = vmatmul.mubr.bf16.gmra.mrb[0].mxu0 %v353
      %v389 = vpop.f32.mrb[0].mxu0
      %v390 = vadd.f32 0.0, %v389
      %v391 = vpop.f32.mrb[0].mxu0
      %v392 = vpop.f32.mrb[0].mxu0
      %v393 = vpop.f32.mrb[0].mxu0
      %394 = vdwg.mxu0
      %v395 = vmax.f32 %v349, %v390
      %396 = vrot.lane.b32.xlu0 %v257, 112
      %v397 = vpop.permute.xlu0 %396
      %v399 = vsel %vm207, %v397, 0
      %401 = vmatprep.subr.bf16.mxu0 0
      %402 = vmatpush1.bf16.msra.mxu0 %v204
      %403 = vmatprep.subr.bf16.mxu0 0
      %404 = vmatpush1.bf16.msra.mxu0 %v213
      %405 = vmatprep.subr.bf16.mxu0 0
      %406 = vmatpush1.bf16.msra.mxu0 0
      %407 = vmatprep.subr.bf16.mxu0 0
      %408 = vmatpush1.bf16.msra.mxu0 0
      %409 = vmatprep.subr.bf16.mxu0 0
      %410 = vmatpush1.bf16.msra.mxu0 0
      %411 = vmatprep.subr.bf16.mxu0 0
      %412 = vmatpush1.bf16.msra.mxu0 0
      %413 = vmatprep.subr.bf16.mxu0 0
      %414 = vmatpush1.bf16.msra.mxu0 0
      %415 = vmatprep.subr.bf16.mxu0 0
      %416 = vmatpush1.bf16.msra.mxu0 0
      %417 = vmatprep.subr.bf16.mxu0 0
      %418 = vmatpush1.bf16.msra.mxu0 0
      %419 = vmatprep.subr.bf16.mxu0 0
      %420 = vmatpush1.bf16.msra.mxu0 0
      %421 = vmatprep.subr.bf16.mxu0 0
      %422 = vmatpush1.bf16.msra.mxu0 0
      %423 = vmatprep.subr.bf16.mxu0 0
      %424 = vmatpush1.bf16.msra.mxu0 0
      %425 = vmatprep.subr.bf16.mxu0 0
      %426 = vmatpush1.bf16.msra.mxu0 0
      %427 = vmatprep.subr.bf16.mxu0 0
      %428 = vmatpush1.bf16.msra.mxu0 0
      %429 = vmatprep.subr.bf16.mxu0 0
      %430 = vmatpush1.bf16.msra.mxu0 0
      %431 = vmatprep.subr.bf16.mxu0 0
      %432 = vmatpush1.bf16.msra.mxu0 0
      %433 = vmatprep.mubr.bf16.mxu0 0
      %434 = vmatmul.mubr.bf16.gmra.mrb[0].mxu0 %v399
      %v435 = vpop.f32.mrb[0].mxu0
      %v436 = vadd.f32 0.0, %v435
      %v437 = vpop.f32.mrb[0].mxu0
      %v438 = vpop.f32.mrb[0].mxu0
      %v439 = vpop.f32.mrb[0].mxu0
      %440 = vdwg.mxu0
      %v441 = vmax.f32 %v395, %v436
      %442 = vrot.lane.b32.xlu0 %v257, 108
      %v443 = vpop.permute.xlu0 %442
      %v445 = vsel %vm207, %v443, 0
      %447 = vmatprep.subr.bf16.mxu0 0
      %448 = vmatpush1.bf16.msra.mxu0 %v204
      %449 = vmatprep.subr.bf16.mxu0 0
      %450 = vmatpush1.bf16.msra.mxu0 %v213
      %451 = vmatprep.subr.bf16.mxu0 0
      %452 = vmatpush1.bf16.msra.mxu0 0
      %453 = vmatprep.subr.bf16.mxu0 0
      %454 = vmatpush1.bf16.msra.mxu0 0
      %455 = vmatprep.subr.bf16.mxu0 0
      %456 = vmatpush1.bf16.msra.mxu0 0
      %457 = vmatprep.subr.bf16.mxu0 0
      %458 = vmatpush1.bf16.msra.mxu0 0
      %459 = vmatprep.subr.bf16.mxu0 0
      %460 = vmatpush1.bf16.msra.mxu0 0
      %461 = vmatprep.subr.bf16.mxu0 0
      %462 = vmatpush1.bf16.msra.mxu0 0
      %463 = vmatprep.subr.bf16.mxu0 0
      %464 = vmatpush1.bf16.msra.mxu0 0
      %465 = vmatprep.subr.bf16.mxu0 0
      %466 = vmatpush1.bf16.msra.mxu0 0
      %467 = vmatprep.subr.bf16.mxu0 0
      %468 = vmatpush1.bf16.msra.mxu0 0
      %469 = vmatprep.subr.bf16.mxu0 0
      %470 = vmatpush1.bf16.msra.mxu0 0
      %471 = vmatprep.subr.bf16.mxu0 0
      %472 = vmatpush1.bf16.msra.mxu0 0
      %473 = vmatprep.subr.bf16.mxu0 0
      %474 = vmatpush1.bf16.msra.mxu0 0
      %475 = vmatprep.subr.bf16.mxu0 0
      %476 = vmatpush1.bf16.msra.mxu0 0
      %477 = vmatprep.subr.bf16.mxu0 0
      %478 = vmatpush1.bf16.msra.mxu0 0
      %479 = vmatprep.mubr.bf16.mxu0 0
      %480 = vmatmul.mubr.bf16.gmra.mrb[0].mxu0 %v445
      %v481 = vpop.f32.mrb[0].mxu0
      %v482 = vadd.f32 0.0, %v481
      %v483 = vpop.f32.mrb[0].mxu0
      %v484 = vpop.f32.mrb[0].mxu0
      %v485 = vpop.f32.mrb[0].mxu0
      %486 = vdwg.mxu0
      %v487 = vmax.f32 %v441, %v482
      %488 = vrot.lane.b32.xlu0 %v257, 104
      %v489 = vpop.permute.xlu0 %488
      %v491 = vsel %vm207, %v489, 0
      %493 = vmatprep.subr.bf16.mxu0 0
      %494 = vmatpush1.bf16.msra.mxu0 %v204
      %495 = vmatprep.subr.bf16.mxu0 0
      %496 = vmatpush1.bf16.msra.mxu0 %v213
      %497 = vmatprep.subr.bf16.mxu0 0
      %498 = vmatpush1.bf16.msra.mxu0 0
      %499 = vmatprep.subr.bf16.mxu0 0
      %500 = vmatpush1.bf16.msra.mxu0 0
      %501 = vmatprep.subr.bf16.mxu0 0
      %502 = vmatpush1.bf16.msra.mxu0 0
      %503 = vmatprep.subr.bf16.mxu0 0
      %504 = vmatpush1.bf16.msra.mxu0 0
      %505 = vmatprep.subr.bf16.mxu0 0
      %506 = vmatpush1.bf16.msra.mxu0 0
      %507 = vmatprep.subr.bf16.mxu0 0
      %508 = vmatpush1.bf16.msra.mxu0 0
      %509 = vmatprep.subr.bf16.mxu0 0
      %510 = vmatpush1.bf16.msra.mxu0 0
      %511 = vmatprep.subr.bf16.mxu0 0
      %512 = vmatpush1.bf16.msra.mxu0 0
      %513 = vmatprep.subr.bf16.mxu0 0
      %514 = vmatpush1.bf16.msra.mxu0 0
      %515 = vmatprep.subr.bf16.mxu0 0
      %516 = vmatpush1.bf16.msra.mxu0 0
      %517 = vmatprep.subr.bf16.mxu0 0
      %518 = vmatpush1.bf16.msra.mxu0 0
      %519 = vmatprep.subr.bf16.mxu0 0
      %520 = vmatpush1.bf16.msra.mxu0 0
      %521 = vmatprep.subr.bf16.mxu0 0
      %522 = vmatpush1.bf16.msra.mxu0 0
      %523 = vmatprep.subr.bf16.mxu0 0
      %524 = vmatpush1.bf16.msra.mxu0 0
      %525 = vmatprep.mubr.bf16.mxu0 0
      %526 = vmatmul.mubr.bf16.gmra.mrb[0].mxu0 %v491
      %v527 = vpop.f32.mrb[0].mxu0
      %v528 = vadd.f32 0.0, %v527
      %v529 = vpop.f32.mrb[0].mxu0
      %v530 = vpop.f32.mrb[0].mxu0
      %v531 = vpop.f32.mrb[0].mxu0
      %532 = vdwg.mxu0
      %v533 = vmax.f32 %v487, %v528
      %534 = vrot.lane.b32.xlu0 %v257, 100
      %v535 = vpop.permute.xlu0 %534
      %v537 = vsel %vm207, %v535, 0
      %539 = vmatprep.subr.bf16.mxu0 0
      %540 = vmatpush1.bf16.msra.mxu0 %v204
      %541 = vmatprep.subr.bf16.mxu0 0
      %542 = vmatpush1.bf16.msra.mxu0 %v213
      %543 = vmatprep.subr.bf16.mxu0 0
      %544 = vmatpush1.bf16.msra.mxu0 0
      %545 = vmatprep.subr.bf16.mxu0 0
      %546 = vmatpush1.bf16.msra.mxu0 0
      %547 = vmatprep.subr.bf16.mxu0 0
      %548 = vmatpush1.bf16.msra.mxu0 0
      %549 = vmatprep.subr.bf16.mxu0 0
      %550 = vmatpush1.bf16.msra.mxu0 0
      %551 = vmatprep.subr.bf16.mxu0 0
      %552 = vmatpush1.bf16.msra.mxu0 0
      %553 = vmatprep.subr.bf16.mxu0 0
      %554 = vmatpush1.bf16.msra.mxu0 0
      %555 = vmatprep.subr.bf16.mxu0 0
      %556 = vmatpush1.bf16.msra.mxu0 0
      %557 = vmatprep.subr.bf16.mxu0 0
      %558 = vmatpush1.bf16.msra.mxu0 0
      %559 = vmatprep.subr.bf16.mxu0 0
      %560 = vmatpush1.bf16.msra.mxu0 0
      %561 = vmatprep.subr.bf16.mxu0 0
      %562 = vmatpush1.bf16.msra.mxu0 0
      %563 = vmatprep.subr.bf16.mxu0 0
      %564 = vmatpush1.bf16.msra.mxu0 0
      %565 = vmatprep.subr.bf16.mxu0 0
      %566 = vmatpush1.bf16.msra.mxu0 0
      %567 = vmatprep.subr.bf16.mxu0 0
      %568 = vmatpush1.bf16.msra.mxu0 0
      %569 = vmatprep.subr.bf16.mxu0 0
      %570 = vmatpush1.bf16.msra.mxu0 0
      %571 = vmatprep.mubr.bf16.mxu0 0
      %572 = vmatmul.mubr.bf16.gmra.mrb[0].mxu0 %v537
      %v573 = vpop.f32.mrb[0].mxu0
      %v574 = vadd.f32 0.0, %v573
      %v575 = vpop.f32.mrb[0].mxu0
      %v576 = vpop.f32.mrb[0].mxu0
      %v577 = vpop.f32.mrb[0].mxu0
      %578 = vdwg.mxu0
      %v579 = vmax.f32 %v533, %v574
      %580 = vrot.lane.b32.xlu0 %v257, 96
      %v581 = vpop.permute.xlu0 %580
      %v583 = vsel %vm207, %v581, 0
      %585 = vmatprep.subr.bf16.mxu0 0
      %586 = vmatpush1.bf16.msra.mxu0 %v204
      %587 = vmatprep.subr.bf16.mxu0 0
      %588 = vmatpush1.bf16.msra.mxu0 %v213
      %589 = vmatprep.subr.bf16.mxu0 0
      %590 = vmatpush1.bf16.msra.mxu0 0
      %591 = vmatprep.subr.bf16.mxu0 0
      %592 = vmatpush1.bf16.msra.mxu0 0
      %593 = vmatprep.subr.bf16.mxu0 0
      %594 = vmatpush1.bf16.msra.mxu0 0
      %595 = vmatprep.subr.bf16.mxu0 0
      %596 = vmatpush1.bf16.msra.mxu0 0
      %597 = vmatprep.subr.bf16.mxu0 0
      %598 = vmatpush1.bf16.msra.mxu0 0
      %599 = vmatprep.subr.bf16.mxu0 0
      %600 = vmatpush1.bf16.msra.mxu0 0
      %601 = vmatprep.subr.bf16.mxu0 0
      %602 = vmatpush1.bf16.msra.mxu0 0
      %603 = vmatprep.subr.bf16.mxu0 0
      %604 = vmatpush1.bf16.msra.mxu0 0
      %605 = vmatprep.subr.bf16.mxu0 0
      %606 = vmatpush1.bf16.msra.mxu0 0
      %607 = vmatprep.subr.bf16.mxu0 0
      %608 = vmatpush1.bf16.msra.mxu0 0
      %609 = vmatprep.subr.bf16.mxu0 0
      %610 = vmatpush1.bf16.msra.mxu0 0
      %611 = vmatprep.subr.bf16.mxu0 0
      %612 = vmatpush1.bf16.msra.mxu0 0
      %613 = vmatprep.subr.bf16.mxu0 0
      %614 = vmatpush1.bf16.msra.mxu0 0
      %615 = vmatprep.subr.bf16.mxu0 0
      %616 = vmatpush1.bf16.msra.mxu0 0
      %617 = vmatprep.mubr.bf16.mxu0 0
      %618 = vmatmul.mubr.bf16.gmra.mrb[0].mxu0 %v583
      %v619 = vpop.f32.mrb[0].mxu0
      %v620 = vadd.f32 0.0, %v619
      %v621 = vpop.f32.mrb[0].mxu0
      %v622 = vpop.f32.mrb[0].mxu0
      %v623 = vpop.f32.mrb[0].mxu0
      %624 = vdwg.mxu0
      %v625 = vmax.f32 %v579, %v620
      %626 = vrot.lane.b32.xlu0 %v257, 92
      %v627 = vpop.permute.xlu0 %626
      %v629 = vsel %vm207, %v627, 0
      %631 = vmatprep.subr.bf16.mxu0 0
      %632 = vmatpush1.bf16.msra.mxu0 %v204
      %633 = vmatprep.subr.bf16.mxu0 0
      %634 = vmatpush1.bf16.msra.mxu0 %v213
      %635 = vmatprep.subr.bf16.mxu0 0
      %636 = vmatpush1.bf16.msra.mxu0 0
      %637 = vmatprep.subr.bf16.mxu0 0
      %638 = vmatpush1.bf16.msra.mxu0 0
      %639 = vmatprep.subr.bf16.mxu0 0
      %640 = vmatpush1.bf16.msra.mxu0 0
      %641 = vmatprep.subr.bf16.mxu0 0
      %642 = vmatpush1.bf16.msra.mxu0 0
      %643 = vmatprep.subr.bf16.mxu0 0
      %644 = vmatpush1.bf16.msra.mxu0 0
      %645 = vmatprep.subr.bf16.mxu0 0
      %646 = vmatpush1.bf16.msra.mxu0 0
      %647 = vmatprep.subr.bf16.mxu0 0
      %648 = vmatpush1.bf16.msra.mxu0 0
      %649 = vmatprep.subr.bf16.mxu0 0
      %650 = vmatpush1.bf16.msra.mxu0 0
      %651 = vmatprep.subr.bf16.mxu0 0
      %652 = vmatpush1.bf16.msra.mxu0 0
      %653 = vmatprep.subr.bf16.mxu0 0
      %654 = vmatpush1.bf16.msra.mxu0 0
      %655 = vmatprep.subr.bf16.mxu0 0
      %656 = vmatpush1.bf16.msra.mxu0 0
      %657 = vmatprep.subr.bf16.mxu0 0
      %658 = vmatpush1.bf16.msra.mxu0 0
      %659 = vmatprep.subr.bf16.mxu0 0
      %660 = vmatpush1.bf16.msra.mxu0 0
      %661 = vmatprep.subr.bf16.mxu0 0
      %662 = vmatpush1.bf16.msra.mxu0 0
      %663 = vmatprep.mubr.bf16.mxu0 0
      %664 = vmatmul.mubr.bf16.gmra.mrb[0].mxu0 %v629
      %v665 = vpop.f32.mrb[0].mxu0
      %v666 = vadd.f32 0.0, %v665
      %v667 = vpop.f32.mrb[0].mxu0
      %v668 = vpop.f32.mrb[0].mxu0
      %v669 = vpop.f32.mrb[0].mxu0
      %670 = vdwg.mxu0
      %v671 = vmax.f32 %v625, %v666
      %672 = vrot.lane.b32.xlu0 %v257, 88
      %v673 = vpop.permute.xlu0 %672
      %v675 = vsel %vm207, %v673, 0
      %677 = vmatprep.subr.bf16.mxu0 0
      %678 = vmatpush1.bf16.msra.mxu0 %v204
      %679 = vmatprep.subr.bf16.mxu0 0
      %680 = vmatpush1.bf16.msra.mxu0 %v213
      %681 = vmatprep.subr.bf16.mxu0 0
      %682 = vmatpush1.bf16.msra.mxu0 0
      %683 = vmatprep.subr.bf16.mxu0 0
      %684 = vmatpush1.bf16.msra.mxu0 0
      %685 = vmatprep.subr.bf16.mxu0 0
      %686 = vmatpush1.bf16.msra.mxu0 0
      %687 = vmatprep.subr.bf16.mxu0 0
      %688 = vmatpush1.bf16.msra.mxu0 0
      %689 = vmatprep.subr.bf16.mxu0 0
      %690 = vmatpush1.bf16.msra.mxu0 0
      %691 = vmatprep.subr.bf16.mxu0 0
      %692 = vmatpush1.bf16.msra.mxu0 0
      %693 = vmatprep.subr.bf16.mxu0 0
      %694 = vmatpush1.bf16.msra.mxu0 0
      %695 = vmatprep.subr.bf16.mxu0 0
      %696 = vmatpush1.bf16.msra.mxu0 0
      %697 = vmatprep.subr.bf16.mxu0 0
      %698 = vmatpush1.bf16.msra.mxu0 0
      %699 = vmatprep.subr.bf16.mxu0 0
      %700 = vmatpush1.bf16.msra.mxu0 0
      %701 = vmatprep.subr.bf16.mxu0 0
      %702 = vmatpush1.bf16.msra.mxu0 0
      %703 = vmatprep.subr.bf16.mxu0 0
      %704 = vmatpush1.bf16.msra.mxu0 0
      %705 = vmatprep.subr.bf16.mxu0 0
      %706 = vmatpush1.bf16.msra.mxu0 0
      %707 = vmatprep.subr.bf16.mxu0 0
      %708 = vmatpush1.bf16.msra.mxu0 0
      %709 = vmatprep.mubr.bf16.mxu0 0
      %710 = vmatmul.mubr.bf16.gmra.mrb[0].mxu0 %v675
      %v711 = vpop.f32.mrb[0].mxu0
      %v712 = vadd.f32 0.0, %v711
      %v713 = vpop.f32.mrb[0].mxu0
      %v714 = vpop.f32.mrb[0].mxu0
      %v715 = vpop.f32.mrb[0].mxu0
      %716 = vdwg.mxu0
      %v717 = vmax.f32 %v671, %v712
      %718 = vrot.lane.b32.xlu0 %v257, 84
      %v719 = vpop.permute.xlu0 %718
      %v721 = vsel %vm207, %v719, 0
      %723 = vmatprep.subr.bf16.mxu0 0
      %724 = vmatpush1.bf16.msra.mxu0 %v204
      %725 = vmatprep.subr.bf16.mxu0 0
      %726 = vmatpush1.bf16.msra.mxu0 %v213
      %727 = vmatprep.subr.bf16.mxu0 0
      %728 = vmatpush1.bf16.msra.mxu0 0
      %729 = vmatprep.subr.bf16.mxu0 0
      %730 = vmatpush1.bf16.msra.mxu0 0
      %731 = vmatprep.subr.bf16.mxu0 0
      %732 = vmatpush1.bf16.msra.mxu0 0
      %733 = vmatprep.subr.bf16.mxu0 0
      %734 = vmatpush1.bf16.msra.mxu0 0
      %735 = vmatprep.subr.bf16.mxu0 0
      %736 = vmatpush1.bf16.msra.mxu0 0
      %737 = vmatprep.subr.bf16.mxu0 0
      %738 = vmatpush1.bf16.msra.mxu0 0
      %739 = vmatprep.subr.bf16.mxu0 0
      %740 = vmatpush1.bf16.msra.mxu0 0
      %741 = vmatprep.subr.bf16.mxu0 0
      %742 = vmatpush1.bf16.msra.mxu0 0
      %743 = vmatprep.subr.bf16.mxu0 0
      %744 = vmatpush1.bf16.msra.mxu0 0
      %745 = vmatprep.subr.bf16.mxu0 0
      %746 = vmatpush1.bf16.msra.mxu0 0
      %747 = vmatprep.subr.bf16.mxu0 0
      %748 = vmatpush1.bf16.msra.mxu0 0
      %749 = vmatprep.subr.bf16.mxu0 0
      %750 = vmatpush1.bf16.msra.mxu0 0
      %751 = vmatprep.subr.bf16.mxu0 0
      %752 = vmatpush1.bf16.msra.mxu0 0
      %753 = vmatprep.subr.bf16.mxu0 0
      %754 = vmatpush1.bf16.msra.mxu0 0
      %755 = vmatprep.mubr.bf16.mxu0 0
      %756 = vmatmul.mubr.bf16.gmra.mrb[0].mxu0 %v721
      %v757 = vpop.f32.mrb[0].mxu0
      %v758 = vadd.f32 0.0, %v757
      %v759 = vpop.f32.mrb[0].mxu0
      %v760 = vpop.f32.mrb[0].mxu0
      %v761 = vpop.f32.mrb[0].mxu0
      %762 = vdwg.mxu0
      %v763 = vmax.f32 %v717, %v758
      %v764 = vmax.f32 %v763, 0.0
      %v765 = vpack.c.bf16 %v764, %v764
      %v766 = vld [vmem:[%s2] sm:$0xf]
      %v767 = vld [vmem:[%s2 + $0x4] sm:$0xf]
      %v768 = vld [vmem:[%s2 + $0x8] sm:$0xf]
      %v769 = vld [vmem:[%s2 + $0xc] sm:$0xf]
      %v770 = vld [vmem:[%s2 + $0x10] sm:$0xf]
      %v771 = vld [vmem:[%s2 + $0x14] sm:$0xf]
      %v772 = vld [vmem:[%s2 + $0x18] sm:$0xf]
      %v773 = vld [vmem:[%s2 + $0x1c] sm:$0xf]
      %v774 = vld [vmem:[%s2 + $0x20] sm:$0xf]
      %v775 = vld [vmem:[%s2 + $0x24] sm:$0xf]
      %v776 = vld [vmem:[%s2 + $0x28] sm:$0xf]
      %v777 = vld [vmem:[%s2 + $0x2c] sm:$0xf]
      %v778 = vld [vmem:[%s2 + $0x30] sm:$0xf]
      %v779 = vld [vmem:[%s2 + $0x34] sm:$0xf]
      %v780 = vld [vmem:[%s2 + $0x38] sm:$0xf]
      %v781 = vld [vmem:[%s2 + $0x3c] sm:$0xf]
      %v782 = vld [vmem:[%s3] sm:$0x1]
      %v784 = vlaneseq
      %v785 = vshrl.u32 %v784, 7
      %v786 = vsub.s32 0, %v785
      %v787 = vrot.slane %v782, %v786
      %v805 = vunpack.c.l.b16 %v766
      %v806 = vunpack.c.l.b16 %v767
      %v807 = vunpack.c.l.b16 %v768
      %v808 = vunpack.c.l.b16 %v769
      %v809 = vunpack.c.l.b16 %v770
      %v810 = vunpack.c.l.b16 %v771
      %v811 = vunpack.c.l.b16 %v772
      %v812 = vunpack.c.l.b16 %v773
      %v813 = vunpack.c.l.b16 %v774
      %v814 = vunpack.c.l.b16 %v775
      %v815 = vunpack.c.l.b16 %v776
      %v816 = vunpack.c.l.b16 %v777
      %v817 = vunpack.c.l.b16 %v778
      %v818 = vunpack.c.l.b16 %v779
      %v819 = vunpack.c.l.b16 %v780
      %v820 = vunpack.c.l.b16 %v781
      %v821 = vpack.c.b16 %v806, %v805
      %v822 = vpack.c.b16 %v808, %v807
      %v823 = vpack.c.b16 %v810, %v809
      %v824 = vpack.c.b16 %v812, %v811
      %v825 = vpack.c.b16 %v814, %v813
      %v826 = vpack.c.b16 %v816, %v815
      %v827 = vpack.c.b16 %v818, %v817
      %v828 = vpack.c.b16 %v820, %v819
      %837 = vmatprep.subr.bf16.mxu0 0
      %838 = vmatpush1.bf16.msra.mxu0 %v821
      %839 = vmatprep.subr.bf16.mxu0 0
      %840 = vmatpush1.bf16.msra.mxu0 %v822
      %841 = vmatprep.subr.bf16.mxu0 0
      %842 = vmatpush1.bf16.msra.mxu0 %v823
      %843 = vmatprep.subr.bf16.mxu0 0
      %844 = vmatpush1.bf16.msra.mxu0 %v824
      %845 = vmatprep.subr.bf16.mxu0 0
      %846 = vmatpush1.bf16.msra.mxu0 %v825
      %847 = vmatprep.subr.bf16.mxu0 0
      %848 = vmatpush1.bf16.msra.mxu0 %v826
      %849 = vmatprep.subr.bf16.mxu0 0
      %850 = vmatpush1.bf16.msra.mxu0 %v827
      %851 = vmatprep.subr.bf16.mxu0 0
      %852 = vmatpush1.bf16.msra.mxu0 %v828
      %853 = vmatprep.subr.bf16.mxu0 0
      %854 = vmatpush1.bf16.msra.mxu0 0
      %855 = vmatprep.subr.bf16.mxu0 0
      %856 = vmatpush1.bf16.msra.mxu0 0
      %857 = vmatprep.subr.bf16.mxu0 0
      %858 = vmatpush1.bf16.msra.mxu0 0
      %859 = vmatprep.subr.bf16.mxu0 0
      %860 = vmatpush1.bf16.msra.mxu0 0
      %861 = vmatprep.subr.bf16.mxu0 0
      %862 = vmatpush1.bf16.msra.mxu0 0
      %863 = vmatprep.subr.bf16.mxu0 0
      %864 = vmatpush1.bf16.msra.mxu0 0
      %865 = vmatprep.subr.bf16.mxu0 0
      %866 = vmatpush1.bf16.msra.mxu0 0
      %867 = vmatprep.subr.bf16.mxu0 0
      %868 = vmatpush1.bf16.msra.mxu0 0
      %869 = vmatprep.mubr.bf16.mxu0 0
      %870 = vmatmul.mubr.bf16.gmra.mrb[0].mxu0 %v765
      %v871 = vpop.f32.mrb[0].mxu0
      %v872 = vadd.f32 %v787, %v871
      %v873 = vpop.f32.mrb[0].mxu0
      %v874 = vpop.f32.mrb[0].mxu0
      %v875 = vpop.f32.mrb[0].mxu0
      %876 = vdwg.mxu0
      %vm877 = vcmask 31744
      %878 = vst.msk [vmem:[%s192] sm:$0xff] %vm877, %v872
      %p879 = scmp.lt.s32.totalorder %s15, 1
      %s880 = scalar_select %p879, %s15, 1
      %s881 = smul.addr %s880, 8
      %s882 = scalar_lea.vmem %s4, %s881
      // Predicated region
      $region37: #{best_initial_convnet_forward.1} parent=35 // pred_check
        %p883 = pneg %p122
      $region38: #{best_initial_convnet_forward.1} parent=35 // pred_check_branch
        %885 = sbr.rel (%p883) target = $region40
      $region39: #{best_initial_convnet_forward.1} parent=35 // pred_region
        _
      $region40: #{best_initial_convnet_forward.1} parent=35 // pred_fallthru
        _
    $region36: #{best_initial_convnet_forward.1} parent=5 // pred_fallthru
      _
    %p886 = scmp.le.s32.totalorder 2, %s10
    // Predicated region
    $region41: #{best_initial_convnet_forward.1} parent=5 // pred_check
      %p887 = pneg %p886
    $region42: #{best_initial_convnet_forward.1} parent=5 // pred_check_branch
      %889 = sbr.rel (%p887) target = $region44
    $region43: #{best_initial_convnet_forward.1} parent=5 // pred_region
      %s890 = ssub.s32 %s10, 2
      // Predicated region
      $region45: #{best_initial_convnet_forward.1} parent=43 // pred_check
        %p891 = pneg %p128
      $region46: #{best_initial_convnet_forward.1} parent=43 // pred_check_branch
        %893 = sbr.rel (%p891) target = $region48
      $region47: #{best_initial_convnet_forward.1} parent=43 // pred_region
        %p894 = scmp.lt.s32.totalorder %s16, 1
        %s895 = scalar_select %p894, %s16, 1
        %s896 = smul.addr %s895, 8
        %s897 = scalar_lea.vmem %s4, %s896
      $region48: #{best_initial_convnet_forward.1} parent=43 // pred_fallthru
        _
    $region44: #{best_initial_convnet_forward.1} parent=5 // pred_fallthru
      _
  $region6: #{best_initial_convnet_forward.1} parent=0 // loop_footer
    %s14 = sadd.s32 1, %s10
  $region7: #{best_initial_convnet_forward.1} parent=0 // loop_footer_branch
    %9 = sbr.rel target = $region3
  $region8: #{best_initial_convnet_forward.1} parent=0 // loop_exit
    _

</llo_original>
